<compile_context>
chip_gen: v6e
topology: v6e:2x2x1
jax: 0.10.0
libtpu: 0.0.40
codegen_flags: <defaults>
</compile_context>

<pallas_src>
import math

import jax
import jax.numpy as jnp
from jax.experimental import pallas as pl
from jax.experimental.pallas import tpu as pltpu


def _round_up(x, m):
    return ((x + m - 1) // m) * m


def _choose_batch_tile(B, L_out, lane=128, vmem_row_budget=8 << 20):
    """Pick TB so TB*L_out fills the MXU M dim and the grid has few, even steps."""
    # Approx VMEM bytes per batch row: cols bf16 (double-buffered) + conv f32 temp
    # + pooled/logits/output f32.
    per_row = L_out * lane * 2 * 2 + L_out * lane * 4 + 4 * lane * 4
    max_tb = max(1, vmem_row_budget // per_row)
    # TB granularity: multiple of 8 (output-block sublane rule) and TB*L_out % 256 == 0
    # (v6e/v7x MXU is 2x256x256; this also satisfies v5e's 128-row granularity).
    unit = max(8, 256 // math.gcd(256, L_out))
    # Prefer 2..8 fat, evenly-countable grid steps (v7x has 2 TensorCores).
    for steps in (2, 4, 6, 8):
        tb = _round_up(pl.cdiv(B, steps), unit)
        if tb <= max_tb:
            return tb
    return max(unit, (max_tb // unit) * unit)


def textcnn_kernel(cols_ref, wc_ref, bc_ref, wl_ref, bl_ref, o_ref):
    # cols_ref: (TB, L_out, KE_pad) bf16  im2col'd embeddings (lane-dense, zero-padded)
    # wc_ref  : (KE_pad, F_pad)     bf16  fused conv weight  wc[k*E+e, f] = W[f, e, k]
    # bc_ref  : (1, F_pad)          f32   conv bias
    # wl_ref  : (F_pad, C_pad)      bf16  classifier weight
    # bl_ref  : (1, C_pad)          f32   classifier bias
    # o_ref   : (TB, C_pad)         f32   logits for this batch block
    cols = cols_ref[...]                                            # (TB, L_out, KE_pad)

    # Single fused conv matmul on the MXU (128-deep contraction), f32 accumulate.
    conv = jax.lax.dot_general(
        cols, wc_ref[...],
        dimension_numbers=(((2,), (0,)), ((), ())),
        preferred_element_type=jnp.float32)                         # (TB, L_out, F_pad)

    # Max-pool over time FIRST; bias + ReLU after (equivalent: bias const over t,
    # ReLU monotone) -> epilogue shrinks from (TB, L_out, F) to (TB, F).
    pooled = jnp.max(conv, axis=1)                                  # (TB, F_pad)  XLU
    pooled = jnp.maximum(pooled + bc_ref[...], 0.0)                 # (TB, F_pad)  VPU

    logits = jax.lax.dot_general(
        pooled.astype(wl_ref.dtype), wl_ref[...],
        dimension_numbers=(((1,), (0,)), ((), ())),
        preferred_element_type=jnp.float32)                         # (TB, C_pad)
    o_ref[...] = logits + bl_ref[...]


def textcnn_forward(tokens, emb_table, conv_w, conv_b, lin_w, lin_b, *, padding=1):
    """tokens: (B, L) int32. Returns logits (B, C) float32."""
    B, L = tokens.shape
    V, E = emb_table.shape
    Fn, _, K = conv_w.shape          # PyTorch Conv1d weight layout (F, E, K)
    C = lin_w.shape[0]               # PyTorch Linear weight layout (C, F)

    LANE = 128
    L_pad = L + 2 * padding
    L_out = L_pad - K + 1
    KE = K * E
    KE_pad = _round_up(KE, LANE)
    F_pad = _round_up(Fn, LANE)
    C_pad = _round_up(C, LANE)

    TB = _choose_batch_tile(B, L_out)
    B_blocks = pl.cdiv(B, TB)
    B_pad = B_blocks * TB

    # ---- JAX glue: gather the embedding table straight into im2col layout ----
    PAD_IDX = V                                                     # extra all-zero row
    table = jnp.concatenate(
        [emb_table.astype(jnp.bfloat16), jnp.zeros((1, E), jnp.bfloat16)], axis=0)
    tok = jnp.pad(tokens, ((0, B_pad - B), (0, 0)), constant_values=PAD_IDX)
    tok = jnp.pad(tok, ((0, 0), (padding, padding)), constant_values=PAD_IDX)  # (B_pad, L_pad)
    # tok_cols[b, t, k] = token at position t+k  ->  cols[b, t, k*E+e] = emb_pad[b, t+k, e]
    tok_cols = jnp.stack([tok[:, k:k + L_out] for k in range(K)], axis=-1)     # (B_pad, L_out, K)
    cols = jnp.take(table, tok_cols, axis=0).reshape(B_pad, L_out, KE)
    cols = jnp.pad(cols, ((0, 0), (0, 0), (0, KE_pad - KE)))        # lane-pad to 128 (bf16)

    # Fused im2col conv weight: wc[k*E + e, f] = conv_w[f, e, k]; zero-pad to lane multiples.
    wc = jnp.transpose(conv_w, (2, 1, 0)).reshape(KE, Fn)
    wc = jnp.pad(wc, ((0, KE_pad - KE), (0, F_pad - Fn))).astype(jnp.bfloat16)
    bc = jnp.pad(conv_b, (0, F_pad - Fn)).reshape(1, F_pad).astype(jnp.float32)
    wl = jnp.pad(jnp.transpose(lin_w, (1, 0)),
                 ((0, F_pad - Fn), (0, C_pad - C))).astype(jnp.bfloat16)
    bl = jnp.pad(lin_b, (0, C_pad - C)).reshape(1, C_pad).astype(jnp.float32)

    out = pl.pallas_call(
        textcnn_kernel,
        out_shape=jax.ShapeDtypeStruct((B_pad, C_pad), jnp.float32),
        grid_spec=pltpu.PrefetchScalarGridSpec(
            num_scalar_prefetch=0,
            grid=(B_blocks,),
            in_specs=[
                pl.BlockSpec((TB, L_out, KE_pad), lambda b: (b, 0, 0)),
                pl.BlockSpec((KE_pad, F_pad),     lambda b: (0, 0)),
                pl.BlockSpec((1, F_pad),          lambda b: (0, 0)),
                pl.BlockSpec((F_pad, C_pad),      lambda b: (0, 0)),
                pl.BlockSpec((1, C_pad),          lambda b: (0, 0)),
            ],
            out_specs=pl.BlockSpec((TB, C_pad), lambda b: (b, 0)),
        ),
        compiler_params=pltpu.CompilerParams(
            dimension_semantics=("parallel",),
            vmem_limit_bytes=32 * 1024 * 1024),
    )(cols, wc, bc, wl, bl)

    # Drop padded batch rows and padded class columns.
    return out[:B, :C]


def textcnn_reference(tokens, emb_table, conv_w, conv_b, lin_w, lin_b, *, padding=1):
    """Pure-JAX f32 reference mirroring the PyTorch forward."""
    emb = jnp.take(emb_table, tokens, axis=0)                       # (B, L, E)
    x = jnp.pad(emb, ((0, 0), (padding, padding), (0, 0)))          # (B, L_pad, E)
    K = conv_w.shape[2]
    L_out = x.shape[1] - K + 1
    wc = jnp.transpose(conv_w, (2, 1, 0))                           # (K, E, F)
    conv = sum(jnp.einsum('ble,ef->blf', x[:, k:k + L_out, :], wc[k])
               for k in range(K)) + conv_b[None, None, :]
    conv = jnp.maximum(conv, 0.0)
    pooled = jnp.max(conv, axis=1)                                  # (B, F)
    return pooled @ lin_w.T + lin_b[None, :]


if __name__ == "__main__":
    # Small synthetic config consistent with the module's constructor.
    vocab_size, embedding_dim, filter_size, num_filter, num_class = 50, 32, 3, 64, 5
    batch, seq_len = 2, 16

    key = jax.random.PRNGKey(0)
    k_tok, k_emb, k_cw, k_cb, k_lw, k_lb = jax.random.split(key, 6)

    tokens = jax.random.randint(k_tok, (batch, seq_len), 0, vocab_size, jnp.int32)
    emb_table = jax.random.normal(k_emb, (vocab_size, embedding_dim), jnp.float32) * 0.1
    conv_w = jax.random.normal(k_cw, (num_filter, embedding_dim, filter_size),
                               jnp.float32) * 0.1
    conv_b = jax.random.normal(k_cb, (num_filter,), jnp.float32) * 0.1
    lin_w = jax.random.normal(k_lw, (num_class, num_filter), jnp.float32) * 0.1
    lin_b = jax.random.normal(k_lb, (num_class,), jnp.float32) * 0.1

    logits = textcnn_forward(tokens, emb_table, conv_w, conv_b, lin_w, lin_b)
    logits = jax.block_until_ready(logits)

    ref = textcnn_reference(tokens, emb_table, conv_w, conv_b, lin_w, lin_b)
    assert logits.shape == (batch, num_class)
    # bf16 activations/weights inside the kernel -> loosened tolerance vs. f32 ref.
    assert jnp.allclose(logits, ref, atol=3e-2, rtol=3e-2), (logits, ref)

    print("KERNEL_OK")
</pallas_src>

<mosaic_0001>
module attributes {stable_mosaic.version = 11 : i64} {
  func.func @textcnn_kernel(%arg0: i32, %arg1: memref<16x16x128xbf16, #tpu.memory_space<vmem>>, %arg2: memref<128x128xbf16, #tpu.memory_space<vmem>>, %arg3: memref<1x128xf32, #tpu.memory_space<vmem>>, %arg4: memref<128x128xbf16, #tpu.memory_space<vmem>>, %arg5: memref<1x128xf32, #tpu.memory_space<vmem>>, %arg6: memref<16x128xf32, #tpu.memory_space<vmem>>) attributes {dimension_semantics = [#tpu.dimension_semantics<parallel>], iteration_bounds = array<i64: 1>, scalar_prefetch = 0 : i64, scratch_operands = 0 : i64, tpu.core_type = #tpu.core_type<tc>, window_params = [{transform_indices = @transform_0, window_bounds = array<i64: 16, 16, 128>}, {pipeline_mode = #tpu.pipeline_mode<synchronous>, transform_indices = @transform_1, window_bounds = array<i64: 128, 128>}, {pipeline_mode = #tpu.pipeline_mode<synchronous>, transform_indices = @transform_2, window_bounds = array<i64: 1, 128>}, {pipeline_mode = #tpu.pipeline_mode<synchronous>, transform_indices = @transform_3, window_bounds = array<i64: 128, 128>}, {pipeline_mode = #tpu.pipeline_mode<synchronous>, transform_indices = @transform_4, window_bounds = array<i64: 1, 128>}, {transform_indices = @transform_5, window_bounds = array<i64: 16, 128>}]} {
    %c0 = arith.constant 0 : index
    %c0_0 = arith.constant 0 : index
    %c0_1 = arith.constant 0 : index
    %0 = vector.load %arg1[%c0, %c0_0, %c0_1] : memref<16x16x128xbf16, #tpu.memory_space<vmem>>, vector<16x16x128xbf16>
    %c0_2 = arith.constant 0 : index
    %c0_3 = arith.constant 0 : index
    %1 = vector.load %arg2[%c0_2, %c0_3] : memref<128x128xbf16, #tpu.memory_space<vmem>>, vector<128x128xbf16>
    %cst = arith.constant dense<0.000000e+00> : vector<16x16x128xf32>
    %2 = tpu.matmul %0, %1, %cst {dimension_numbers = #tpu.dot_dimension_numbers<[2], [0], [0, 1], [1], [0, 0, 0, 1, 1, 1], [], []>} : vector<16x16x128xbf16>, vector<128x128xbf16>, vector<16x16x128xf32> -> vector<16x16x128xf32>
    %cst_4 = arith.constant dense<0xFF800000> : vector<16x128xf32>
    %3 = vector.multi_reduction <maximumf>, %2, %cst_4 [1] : vector<16x16x128xf32> to vector<16x128xf32>
    %c0_5 = arith.constant 0 : index
    %c0_6 = arith.constant 0 : index
    %4 = vector.load %arg3[%c0_5, %c0_6] : memref<1x128xf32, #tpu.memory_space<vmem>>, vector<1x128xf32>
    %5 = vector.broadcast %4 : vector<1x128xf32> to vector<16x128xf32>
    %6 = arith.addf %3, %5 : vector<16x128xf32>
    %cst_7 = arith.constant 0.000000e+00 : f32
    %7 = vector.broadcast %cst_7 : f32 to vector<16x128xf32>
    %8 = arith.maximumf %6, %7 : vector<16x128xf32>
    %9 = arith.truncf %8 : vector<16x128xf32> to vector<16x128xbf16>
    %c0_8 = arith.constant 0 : index
    %c0_9 = arith.constant 0 : index
    %10 = vector.load %arg4[%c0_8, %c0_9] : memref<128x128xbf16, #tpu.memory_space<vmem>>, vector<128x128xbf16>
    %cst_10 = arith.constant dense<0.000000e+00> : vector<16x128xf32>
    %11 = tpu.matmul %9, %10, %cst_10 {dimension_numbers = #tpu.dot_dimension_numbers<[1], [0], [0], [1], [0, 0, 1, 1], [], []>} : vector<16x128xbf16>, vector<128x128xbf16>, vector<16x128xf32> -> vector<16x128xf32>
    %c0_11 = arith.constant 0 : index
    %c0_12 = arith.constant 0 : index
    %12 = vector.load %arg5[%c0_11, %c0_12] : memref<1x128xf32, #tpu.memory_space<vmem>>, vector<1x128xf32>
    %13 = vector.broadcast %12 : vector<1x128xf32> to vector<16x128xf32>
    %14 = arith.addf %11, %13 : vector<16x128xf32>
    %c0_13 = arith.constant 0 : index
    %c0_14 = arith.constant 0 : index
    %15 = vector.load %arg6[%c0_13, %c0_14] : memref<16x128xf32, #tpu.memory_space<vmem>>, vector<16x128xf32>
    tpu.vector_store %arg6[%c0_13, %c0_14], %14 {strides = array<i32>} : memref<16x128xf32, #tpu.memory_space<vmem>>, vector<16x128xf32>,
    return
  }
  func.func @transform_0(%arg0: i32) -> (i32, i32, i32) {
    %c0_i32 = arith.constant 0 : i32
    %c0_i32_0 = arith.constant 0 : i32
    %c0_i32_1 = arith.constant 0 : i32
    return %arg0, %c0_i32, %c0_i32_0 : i32, i32, i32
  }
  func.func @transform_1(%arg0: i32) -> (i32, i32) {
    %c0_i32 = arith.constant 0 : i32
    %c0_i32_0 = arith.constant 0 : i32
    %c0_i32_1 = arith.constant 0 : i32
    return %c0_i32, %c0_i32_0 : i32, i32
  }
  func.func @transform_2(%arg0: i32) -> (i32, i32) {
    %c0_i32 = arith.constant 0 : i32
    %c0_i32_0 = arith.constant 0 : i32
    %c0_i32_1 = arith.constant 0 : i32
    return %c0_i32, %c0_i32_0 : i32, i32
  }
  func.func @transform_3(%arg0: i32) -> (i32, i32) {
    %c0_i32 = arith.constant 0 : i32
    %c0_i32_0 = arith.constant 0 : i32
    %c0_i32_1 = arith.constant 0 : i32
    return %c0_i32, %c0_i32_0 : i32, i32
  }
  func.func @transform_4(%arg0: i32) -> (i32, i32) {
    %c0_i32 = arith.constant 0 : i32
    %c0_i32_0 = arith.constant 0 : i32
    %c0_i32_1 = arith.constant 0 : i32
    return %c0_i32, %c0_i32_0 : i32, i32
  }
  func.func @transform_5(%arg0: i32) -> (i32, i32) {
    %c0_i32 = arith.constant 0 : i32
    %c0_i32_0 = arith.constant 0 : i32
    return %arg0, %c0_i32 : i32, i32
  }
}

</mosaic_0001>

<llo_original>
// kernel: tpu_custom_call.1
$region0: #{tpu_custom_call.1}
  #allocation0 [shape = 'u32[]', space=smem, size = 0x4, offset = 0x4, fixed_abs, tag = 'smem constant byte address 0x4 - core index']
  #allocation1 [shape = 'u32[144,128]{1,0:T(1,128)}', space=vmem, size = 0x12000, scoped, tag = 'internal scratch']
  %s0 = inlined_call_operand.hbm [shape: bf16[16,16,128], index: 0, kind: input, shape index: {}]
  %s1 = inlined_call_operand.hbm [shape: bf16[128,128], index: 1, kind: input, shape index: {}]
  %s2 = inlined_call_operand.vmem [shape: f32[1,128], index: 2, kind: input, shape index: {}]
  %s3 = inlined_call_operand.hbm [shape: bf16[128,128], index: 3, kind: input, shape index: {}]
  %s4 = inlined_call_operand.vmem [shape: f32[1,128], index: 4, kind: input, shape index: {}]
  %s5 = inlined_call_operand.hbm [shape: f32[16,128], index: 5, kind: output, shape index: {}]
  %s6 = sld [smem:[#allocation0]]
  $region42: #{tpu_custom_call.1} parent=0
    _
  %s8 = ssub.s32 1, %s6
  %s9 = scalar_select 0, %s8, %s6
  $region1: #{tpu_custom_call.1} parent=0
    #allocation2 [shape = 'u8[65536]{0}', space=vmem, size = 0x10000, scoped, tag = 'input window, operand 0, single buffered']
    #allocation3 [shape = 's32[1]{0}', space=sflag, size = 0x4, scoped, tag = 'scoped memory for tpu_custom_call.1']
    #allocation4 [shape = 's32[1]{0}', space=sflag, size = 0x4, scoped, tag = 'scoped memory for tpu_custom_call.1']
    #allocation5 [shape = 'u8[32768]{0}', space=vmem, size = 0x8000, scoped, tag = 'input window, operand 1, single buffered']
    #allocation6 [shape = 's32[1]{0}', space=sflag, size = 0x4, scoped, tag = 'scoped memory for tpu_custom_call.1']
    #allocation7 [shape = 'u8[32768]{0}', space=vmem, size = 0x8000, scoped, tag = 'input window, operand 3, single buffered']
    #allocation8 [shape = 'u8[8192]{0}', space=vmem, size = 0x2000, scoped, tag = 'output window, operand 0, single buffered']
    %10 = vsyncpa [#allocation3], 0
    %11 = vsyncpa [#allocation6], 0
    %12 = vsyncpa [#allocation4], 0
    // Predicated region
    $region2: #{tpu_custom_call.1} parent=1 // pred_check
      _
    $region3: #{tpu_custom_call.1} parent=1 // pred_check_branch
      %14 = sbr.rel (0) target = $region5
    $region4: #{tpu_custom_call.1} parent=1 // pred_region
      %s16 = ssub.s32 2048, 2048
      %17 = vsyncadd [#allocation3], %s16
      %s18 = sshll.u32 [#allocation2], 4
      %s19 = int_to_ptr.vmem [resolvable:$true] %s18
      %24 = dma.hbm_to_vmem [thread:$0]  %s0, 2048, %s19, [#allocation3], 64, 64, 4
    $region5: #{tpu_custom_call.1} parent=1 // pred_fallthru
      _
    // Predicated region
    $region6: #{tpu_custom_call.1} parent=1 // pred_check
      _
    $region7: #{tpu_custom_call.1} parent=1 // pred_check_branch
      %26 = sbr.rel (0) target = $region9
    $region8: #{tpu_custom_call.1} parent=1 // pred_region
      %s28 = ssub.s32 1024, 1024
      %29 = vsyncadd [#allocation6], %s28
      %s30 = sshll.u32 [#allocation5], 4
      %s31 = int_to_ptr.vmem [resolvable:$true] %s30
      %36 = dma.hbm_to_vmem [thread:$0]  %s1, 1024, %s31, [#allocation6], 64, 64, 4
    $region9: #{tpu_custom_call.1} parent=1 // pred_fallthru
      _
    // Predicated region
    $region10: #{tpu_custom_call.1} parent=1 // pred_check
      _
    $region11: #{tpu_custom_call.1} parent=1 // pred_check_branch
      %38 = sbr.rel (0) target = $region13
    $region12: #{tpu_custom_call.1} parent=1 // pred_region
      _
    $region13: #{tpu_custom_call.1} parent=1 // pred_fallthru
      _
    // Predicated region
    $region14: #{tpu_custom_call.1} parent=1 // pred_check
      _
    $region15: #{tpu_custom_call.1} parent=1 // pred_check_branch
      %40 = sbr.rel (0) target = $region17
    $region16: #{tpu_custom_call.1} parent=1 // pred_region
      %s42 = ssub.s32 1024, 1024
      %43 = vsyncadd [#allocation6], %s42
      %s44 = sshll.u32 [#allocation7], 4
      %s45 = int_to_ptr.vmem [resolvable:$true] %s44
      %50 = dma.hbm_to_vmem [thread:$0]  %s3, 1024, %s45, [#allocation6], 64, 64, 4
    $region17: #{tpu_custom_call.1} parent=1 // pred_fallthru
      _
    // Predicated region
    $region18: #{tpu_custom_call.1} parent=1 // pred_check
      _
    $region19: #{tpu_custom_call.1} parent=1 // pred_check_branch
      %52 = sbr.rel (0) target = $region21
    $region20: #{tpu_custom_call.1} parent=1 // pred_region
      _
    $region21: #{tpu_custom_call.1} parent=1 // pred_fallthru
      _
    // Predicated region
    $region22: #{tpu_custom_call.1} parent=1 // pred_check
      _
    $region23: #{tpu_custom_call.1} parent=1 // pred_check_branch
      %54 = sbr.rel (0) target = $region25
    $region24: #{tpu_custom_call.1} parent=1 // pred_region
      %55 = dma.done [#allocation3], 2048
    $region25: #{tpu_custom_call.1} parent=1 // pred_fallthru
      _
    // Predicated region
    $region26: #{tpu_custom_call.1} parent=1 // pred_check
      _
    $region27: #{tpu_custom_call.1} parent=1 // pred_check_branch
      %57 = sbr.rel (0) target = $region29
    $region28: #{tpu_custom_call.1} parent=1 // pred_region
      %58 = dma.done [#allocation6], 1024
    $region29: #{tpu_custom_call.1} parent=1 // pred_fallthru
      _
    // Predicated region
    $region30: #{tpu_custom_call.1} parent=1 // pred_check
      _
    $region31: #{tpu_custom_call.1} parent=1 // pred_check_branch
      %60 = sbr.rel (0) target = $region33
    $region32: #{tpu_custom_call.1} parent=1 // pred_region
      %61 = dma.done [#allocation6], 1024
    $region33: #{tpu_custom_call.1} parent=1 // pred_fallthru
      _
    %v63 = vld [vmem:[#allocation2] sm:$0xf]
    %v64 = vld [vmem:[#allocation2 + $0x4] sm:$0xf]
    %v65 = vld [vmem:[#allocation2 + $0x8] sm:$0xf]
    %v66 = vld [vmem:[#allocation2 + $0xc] sm:$0xf]
    %v67 = vld [vmem:[#allocation2 + $0x10] sm:$0xf]
    %v68 = vld [vmem:[#allocation2 + $0x14] sm:$0xf]
    %v69 = vld [vmem:[#allocation2 + $0x18] sm:$0xf]
    %v70 = vld [vmem:[#allocation2 + $0x1c] sm:$0xf]
    %v71 = vld [vmem:[#allocation2 + $0x20] sm:$0xf]
    %v72 = vld [vmem:[#allocation2 + $0x24] sm:$0xf]
    %v73 = vld [vmem:[#allocation2 + $0x28] sm:$0xf]
    %v74 = vld [vmem:[#allocation2 + $0x2c] sm:$0xf]
    %v75 = vld [vmem:[#allocation2 + $0x30] sm:$0xf]
    %v76 = vld [vmem:[#allocation2 + $0x34] sm:$0xf]
    %v77 = vld [vmem:[#allocation2 + $0x38] sm:$0xf]
    %v78 = vld [vmem:[#allocation2 + $0x3c] sm:$0xf]
    %v79 = vld [vmem:[#allocation2 + $0x40] sm:$0xf]
    %v80 = vld [vmem:[#allocation2 + $0x44] sm:$0xf]
    %v81 = vld [vmem:[#allocation2 + $0x48] sm:$0xf]
    %v82 = vld [vmem:[#allocation2 + $0x4c] sm:$0xf]
    %v83 = vld [vmem:[#allocation2 + $0x50] sm:$0xf]
    %v84 = vld [vmem:[#allocation2 + $0x54] sm:$0xf]
    %v85 = vld [vmem:[#allocation2 + $0x58] sm:$0xf]
    %v86 = vld [vmem:[#allocation2 + $0x5c] sm:$0xf]
    %v87 = vld [vmem:[#allocation2 + $0x60] sm:$0xf]
    %v88 = vld [vmem:[#allocation2 + $0x64] sm:$0xf]
    %v89 = vld [vmem:[#allocation2 + $0x68] sm:$0xf]
    %v90 = vld [vmem:[#allocation2 + $0x6c] sm:$0xf]
    %v91 = vld [vmem:[#allocation2 + $0x70] sm:$0xf]
    %v92 = vld [vmem:[#allocation2 + $0x74] sm:$0xf]
    %v93 = vld [vmem:[#allocation2 + $0x78] sm:$0xf]
    %v94 = vld [vmem:[#allocation2 + $0x7c] sm:$0xf]
    %v95 = vld [vmem:[#allocation5] sm:$0xf]
    %v96 = vld [vmem:[#allocation5 + $0x4] sm:$0xf]
    %v97 = vld [vmem:[#allocation5 + $0x8] sm:$0xf]
    %v98 = vld [vmem:[#allocation5 + $0xc] sm:$0xf]
    %v99 = vld [vmem:[#allocation5 + $0x10] sm:$0xf]
    %v100 = vld [vmem:[#allocation5 + $0x14] sm:$0xf]
    %v101 = vld [vmem:[#allocation5 + $0x18] sm:$0xf]
    %v102 = vld [vmem:[#allocation5 + $0x1c] sm:$0xf]
    %v103 = vld [vmem:[#allocation5 + $0x20] sm:$0xf]
    %v104 = vld [vmem:[#allocation5 + $0x24] sm:$0xf]
    %v105 = vld [vmem:[#allocation5 + $0x28] sm:$0xf]
    %v106 = vld [vmem:[#allocation5 + $0x2c] sm:$0xf]
    %v107 = vld [vmem:[#allocation5 + $0x30] sm:$0xf]
    %v108 = vld [vmem:[#allocation5 + $0x34] sm:$0xf]
    %v109 = vld [vmem:[#allocation5 + $0x38] sm:$0xf]
    %v110 = vld [vmem:[#allocation5 + $0x3c] sm:$0xf]
    %v143 = vunpack.c.l.b16 %v63
    %v144 = vunpack.c.l.b16 %v64
    %v145 = vunpack.c.l.b16 %v65
    %v146 = vunpack.c.l.b16 %v66
    %v147 = vunpack.c.l.b16 %v67
    %v148 = vunpack.c.l.b16 %v68
    %v149 = vunpack.c.l.b16 %v69
    %v150 = vunpack.c.l.b16 %v70
    %v151 = vunpack.c.l.b16 %v71
    %v152 = vunpack.c.l.b16 %v72
    %v153 = vunpack.c.l.b16 %v73
    %v154 = vunpack.c.l.b16 %v74
    %v155 = vunpack.c.l.b16 %v75
    %v156 = vunpack.c.l.b16 %v76
    %v157 = vunpack.c.l.b16 %v77
    %v158 = vunpack.c.l.b16 %v78
    %v159 = vunpack.c.l.b16 %v79
    %v160 = vunpack.c.l.b16 %v80
    %v161 = vunpack.c.l.b16 %v81
    %v162 = vunpack.c.l.b16 %v82
    %v163 = vunpack.c.l.b16 %v83
    %v164 = vunpack.c.l.b16 %v84
    %v165 = vunpack.c.l.b16 %v85
    %v166 = vunpack.c.l.b16 %v86
    %v167 = vunpack.c.l.b16 %v87
    %v168 = vunpack.c.l.b16 %v88
    %v169 = vunpack.c.l.b16 %v89
    %v170 = vunpack.c.l.b16 %v90
    %v171 = vunpack.c.l.b16 %v91
    %v172 = vunpack.c.l.b16 %v92
    %v173 = vunpack.c.l.b16 %v93
    %v174 = vunpack.c.l.b16 %v94
    %v175 = vpack.c.b16 %v144, %v143
    %v176 = vpack.c.b16 %v146, %v145
    %v177 = vpack.c.b16 %v148, %v147
    %v178 = vpack.c.b16 %v150, %v149
    %v179 = vpack.c.b16 %v152, %v151
    %v180 = vpack.c.b16 %v154, %v153
    %v181 = vpack.c.b16 %v156, %v155
    %v182 = vpack.c.b16 %v158, %v157
    %v183 = vpack.c.b16 %v160, %v159
    %v184 = vpack.c.b16 %v162, %v161
    %v185 = vpack.c.b16 %v164, %v163
    %v186 = vpack.c.b16 %v166, %v165
    %v187 = vpack.c.b16 %v168, %v167
    %v188 = vpack.c.b16 %v170, %v169
    %v189 = vpack.c.b16 %v172, %v171
    %v190 = vpack.c.b16 %v174, %v173
    %v223 = vunpack.c.l.b16 %v95
    %v224 = vunpack.c.l.b16 %v96
    %v225 = vunpack.c.l.b16 %v97
    %v226 = vunpack.c.l.b16 %v98
    %v227 = vunpack.c.l.b16 %v99
    %v228 = vunpack.c.l.b16 %v100
    %v229 = vunpack.c.l.b16 %v101
    %v230 = vunpack.c.l.b16 %v102
    %v231 = vunpack.c.l.b16 %v103
    %v232 = vunpack.c.l.b16 %v104
    %v233 = vunpack.c.l.b16 %v105
    %v234 = vunpack.c.l.b16 %v106
    %v235 = vunpack.c.l.b16 %v107
    %v236 = vunpack.c.l.b16 %v108
    %v237 = vunpack.c.l.b16 %v109
    %v238 = vunpack.c.l.b16 %v110
    %v239 = vpack.c.b16 %v224, %v223
    %v240 = vpack.c.b16 %v226, %v225
    %v241 = vpack.c.b16 %v228, %v227
    %v242 = vpack.c.b16 %v230, %v229
    %v243 = vpack.c.b16 %v232, %v231
    %v244 = vpack.c.b16 %v234, %v233
    %v245 = vpack.c.b16 %v236, %v235
    %v246 = vpack.c.b16 %v238, %v237
    %255 = vmatprep.subr.bf16.mxu0 0
    %256 = vmatpush1.bf16.msra.mxu0 %v246
    %257 = vmatprep.subr.bf16.mxu0 0
    %258 = vmatpush1.bf16.msra.mxu0 %v245
    %259 = vmatprep.subr.bf16.mxu0 0
    %260 = vmatpush1.bf16.msra.mxu0 %v244
    %261 = vmatprep.subr.bf16.mxu0 0
    %262 = vmatpush1.bf16.msra.mxu0 %v243
    %263 = vmatprep.subr.bf16.mxu0 0
    %264 = vmatpush1.bf16.msra.mxu0 %v242
    %265 = vmatprep.subr.bf16.mxu0 0
    %266 = vmatpush1.bf16.msra.mxu0 %v241
    %267 = vmatprep.subr.bf16.mxu0 0
    %268 = vmatpush1.bf16.msra.mxu0 %v240
    %269 = vmatprep.subr.bf16.mxu0 0
    %270 = vmatpush1.bf16.msra.mxu0 %v239
    %271 = vmatprep.subr.bf16.mxu0 0
    %272 = vmatpush2.bf16.msra.mxu0 0
    %273 = vmatprep.subr.bf16.mxu0 0
    %274 = vmatpush2.bf16.msra.mxu0 0
    %275 = vmatprep.subr.bf16.mxu0 0
    %276 = vmatpush2.bf16.msra.mxu0 0
    %277 = vmatprep.subr.bf16.mxu0 0
    %278 = vmatpush2.bf16.msra.mxu0 0
    %279 = vmatprep.subr.bf16.mxu0 0
    %280 = vmatpush2.bf16.msra.mxu0 0
    %281 = vmatprep.subr.bf16.mxu0 0
    %282 = vmatpush2.bf16.msra.mxu0 0
    %283 = vmatprep.subr.bf16.mxu0 0
    %284 = vmatpush2.bf16.msra.mxu0 0
    %285 = vmatprep.subr.bf16.mxu0 0
    %286 = vmatpush2.bf16.msra.mxu0 0
    %287 = vmatprep.mubr.bf16.mxu0 0
    %288 = vmatmul.mubr.bf16.gmra.mxu0 %v175
    %v289 = vpop.f32.mrf.mxu0
    %v290 = vadd.f32 0.0, %v289
    %v291 = vpop.f32.mrf.mxu0
    %v292 = vpop.f32.mrf.mxu0
    %v293 = vadd.f32 0.0, %v292
    %v294 = vpop.f32.mrf.mxu0
    %295 = vmatprep.mubr.bf16.mxu0 0
    %296 = vmatmul.mubr.bf16.gmra.mxu0 %v176
    %v297 = vpop.f32.mrf.mxu0
    %v298 = vadd.f32 0.0, %v297
    %v299 = vpop.f32.mrf.mxu0
    %v300 = vpop.f32.mrf.mxu0
    %v301 = vadd.f32 0.0, %v300
    %v302 = vpop.f32.mrf.mxu0
    %303 = vmatprep.mubr.bf16.mxu0 0
    %304 = vmatmul.mubr.bf16.gmra.mxu0 %v177
    %v305 = vpop.f32.mrf.mxu0
    %v306 = vadd.f32 0.0, %v305
    %v307 = vpop.f32.mrf.mxu0
    %v308 = vpop.f32.mrf.mxu0
    %v309 = vadd.f32 0.0, %v308
    %v310 = vpop.f32.mrf.mxu0
    %311 = vmatprep.mubr.bf16.mxu0 0
    %312 = vmatmul.mubr.bf16.gmra.mxu0 %v178
    %v313 = vpop.f32.mrf.mxu0
    %v314 = vadd.f32 0.0, %v313
    %v315 = vpop.f32.mrf.mxu0
    %v316 = vpop.f32.mrf.mxu0
    %v317 = vadd.f32 0.0, %v316
    %v318 = vpop.f32.mrf.mxu0
    %319 = vmatprep.mubr.bf16.mxu0 0
    %320 = vmatmul.mubr.bf16.gmra.mxu0 %v179
    %v321 = vpop.f32.mrf.mxu0
    %v322 = vadd.f32 0.0, %v321
    %v323 = vpop.f32.mrf.mxu0
    %v324 = vpop.f32.mrf.mxu0
    %v325 = vadd.f32 0.0, %v324
    %v326 = vpop.f32.mrf.mxu0
    %327 = vmatprep.mubr.bf16.mxu0 0
    %328 = vmatmul.mubr.bf16.gmra.mxu0 %v180
    %v329 = vpop.f32.mrf.mxu0
    %v330 = vadd.f32 0.0, %v329
    %v331 = vpop.f32.mrf.mxu0
    %v332 = vpop.f32.mrf.mxu0
    %v333 = vadd.f32 0.0, %v332
    %v334 = vpop.f32.mrf.mxu0
    %335 = vmatprep.mubr.bf16.mxu0 0
    %336 = vmatmul.mubr.bf16.gmra.mxu0 %v181
    %v337 = vpop.f32.mrf.mxu0
    %v338 = vadd.f32 0.0, %v337
    %v339 = vpop.f32.mrf.mxu0
    %v340 = vpop.f32.mrf.mxu0
    %v341 = vadd.f32 0.0, %v340
    %v342 = vpop.f32.mrf.mxu0
    %343 = vmatprep.mubr.bf16.mxu0 0
    %344 = vmatmul.mubr.bf16.gmra.mxu0 %v182
    %v345 = vpop.f32.mrf.mxu0
    %v346 = vadd.f32 0.0, %v345
    %v347 = vpop.f32.mrf.mxu0
    %v348 = vpop.f32.mrf.mxu0
    %v349 = vadd.f32 0.0, %v348
    %v350 = vpop.f32.mrf.mxu0
    %351 = vmatprep.mubr.bf16.mxu0 0
    %352 = vmatmul.mubr.bf16.gmra.mxu0 %v183
    %v353 = vpop.f32.mrf.mxu0
    %v354 = vadd.f32 0.0, %v353
    %v355 = vpop.f32.mrf.mxu0
    %v356 = vpop.f32.mrf.mxu0
    %v357 = vadd.f32 0.0, %v356
    %v358 = vpop.f32.mrf.mxu0
    %359 = vmatprep.mubr.bf16.mxu0 0
    %360 = vmatmul.mubr.bf16.gmra.mxu0 %v184
    %v361 = vpop.f32.mrf.mxu0
    %v362 = vadd.f32 0.0, %v361
    %v363 = vpop.f32.mrf.mxu0
    %v364 = vpop.f32.mrf.mxu0
    %v365 = vadd.f32 0.0, %v364
    %v366 = vpop.f32.mrf.mxu0
    %367 = vmatprep.mubr.bf16.mxu0 0
    %368 = vmatmul.mubr.bf16.gmra.mxu0 %v185
    %v369 = vpop.f32.mrf.mxu0
    %v370 = vadd.f32 0.0, %v369
    %v371 = vpop.f32.mrf.mxu0
    %v372 = vpop.f32.mrf.mxu0
    %v373 = vadd.f32 0.0, %v372
    %v374 = vpop.f32.mrf.mxu0
    %375 = vmatprep.mubr.bf16.mxu0 0
    %376 = vmatmul.mubr.bf16.gmra.mxu0 %v186
    %v377 = vpop.f32.mrf.mxu0
    %v378 = vadd.f32 0.0, %v377
    %v379 = vpop.f32.mrf.mxu0
    %v380 = vpop.f32.mrf.mxu0
    %v381 = vadd.f32 0.0, %v380
    %v382 = vpop.f32.mrf.mxu0
    %383 = vmatprep.mubr.bf16.mxu0 0
    %384 = vmatmul.mubr.bf16.gmra.mxu0 %v187
    %v385 = vpop.f32.mrf.mxu0
    %v386 = vadd.f32 0.0, %v385
    %v387 = vpop.f32.mrf.mxu0
    %v388 = vpop.f32.mrf.mxu0
    %v389 = vadd.f32 0.0, %v388
    %v390 = vpop.f32.mrf.mxu0
    %391 = vmatprep.mubr.bf16.mxu0 0
    %392 = vmatmul.mubr.bf16.gmra.mxu0 %v188
    %v393 = vpop.f32.mrf.mxu0
    %v394 = vadd.f32 0.0, %v393
    %v395 = vpop.f32.mrf.mxu0
    %v396 = vpop.f32.mrf.mxu0
    %v397 = vadd.f32 0.0, %v396
    %v398 = vpop.f32.mrf.mxu0
    %399 = vmatprep.mubr.bf16.mxu0 0
    %400 = vmatmul.mubr.bf16.gmra.mxu0 %v189
    %v401 = vpop.f32.mrf.mxu0
    %v402 = vadd.f32 0.0, %v401
    %v403 = vpop.f32.mrf.mxu0
    %v404 = vpop.f32.mrf.mxu0
    %v405 = vadd.f32 0.0, %v404
    %v406 = vpop.f32.mrf.mxu0
    %407 = vmatprep.mubr.bf16.mxu0 0
    %408 = vmatmul.mubr.bf16.gmra.mxu0 %v190
    %v409 = vpop.f32.mrf.mxu0
    %v410 = vadd.f32 0.0, %v409
    %v411 = vpop.f32.mrf.mxu0
    %v412 = vpop.f32.mrf.mxu0
    %v413 = vadd.f32 0.0, %v412
    %v414 = vpop.f32.mrf.mxu0
    %415 = vdwg.mxu0
    %v416 = vmax.f32 %v290, %v293
    %v417 = vrot.slane %v416, 4
    %v418 = vmax.f32 %v416, %v417
    %v419 = vrot.slane %v418, 2
    %v420 = vmax.f32 %v418, %v419
    %v421 = vrot.slane %v420, 1
    %v422 = vmax.f32 %v420, %v421
    %v423 = vmax.f32 %v298, %v301
    %v424 = vrot.slane %v423, 4
    %v425 = vmax.f32 %v423, %v424
    %v426 = vrot.slane %v425, 2
    %v427 = vmax.f32 %v425, %v426
    %v428 = vrot.slane %v427, 1
    %v429 = vmax.f32 %v427, %v428
    %v430 = vmax.f32 %v306, %v309
    %v431 = vrot.slane %v430, 4
    %v432 = vmax.f32 %v430, %v431
    %v433 = vrot.slane %v432, 2
    %v434 = vmax.f32 %v432, %v433
    %v435 = vrot.slane %v434, 1
    %v436 = vmax.f32 %v434, %v435
    %v437 = vmax.f32 %v314, %v317
    %v438 = vrot.slane %v437, 4
    %v439 = vmax.f32 %v437, %v438
    %v440 = vrot.slane %v439, 2
    %v441 = vmax.f32 %v439, %v440
    %v442 = vrot.slane %v441, 1
    %v443 = vmax.f32 %v441, %v442
    %v444 = vmax.f32 %v322, %v325
    %v445 = vrot.slane %v444, 4
    %v446 = vmax.f32 %v444, %v445
    %v447 = vrot.slane %v446, 2
    %v448 = vmax.f32 %v446, %v447
    %v449 = vrot.slane %v448, 1
    %v450 = vmax.f32 %v448, %v449
    %v451 = vmax.f32 %v330, %v333
    %v452 = vrot.slane %v451, 4
    %v453 = vmax.f32 %v451, %v452
    %v454 = vrot.slane %v453, 2
    %v455 = vmax.f32 %v453, %v454
    %v456 = vrot.slane %v455, 1
    %v457 = vmax.f32 %v455, %v456
    %v458 = vmax.f32 %v338, %v341
    %v459 = vrot.slane %v458, 4
    %v460 = vmax.f32 %v458, %v459
    %v461 = vrot.slane %v460, 2
    %v462 = vmax.f32 %v460, %v461
    %v463 = vrot.slane %v462, 1
    %v464 = vmax.f32 %v462, %v463
    %v465 = vmax.f32 %v346, %v349
    %v466 = vrot.slane %v465, 4
    %v467 = vmax.f32 %v465, %v466
    %v468 = vrot.slane %v467, 2
    %v469 = vmax.f32 %v467, %v468
    %v470 = vrot.slane %v469, 1
    %v471 = vmax.f32 %v469, %v470
    %v472 = vmax.f32 %v354, %v357
    %v473 = vrot.slane %v472, 4
    %v474 = vmax.f32 %v472, %v473
    %v475 = vrot.slane %v474, 2
    %v476 = vmax.f32 %v474, %v475
    %v477 = vrot.slane %v476, 1
    %v478 = vmax.f32 %v476, %v477
    %v479 = vmax.f32 %v362, %v365
    %v480 = vrot.slane %v479, 4
    %v481 = vmax.f32 %v479, %v480
    %v482 = vrot.slane %v481, 2
    %v483 = vmax.f32 %v481, %v482
    %v484 = vrot.slane %v483, 1
    %v485 = vmax.f32 %v483, %v484
    %v486 = vmax.f32 %v370, %v373
    %v487 = vrot.slane %v486, 4
    %v488 = vmax.f32 %v486, %v487
    %v489 = vrot.slane %v488, 2
    %v490 = vmax.f32 %v488, %v489
    %v491 = vrot.slane %v490, 1
    %v492 = vmax.f32 %v490, %v491
    %v493 = vmax.f32 %v378, %v381
    %v494 = vrot.slane %v493, 4
    %v495 = vmax.f32 %v493, %v494
    %v496 = vrot.slane %v495, 2
    %v497 = vmax.f32 %v495, %v496
    %v498 = vrot.slane %v497, 1
    %v499 = vmax.f32 %v497, %v498
    %v500 = vmax.f32 %v386, %v389
    %v501 = vrot.slane %v500, 4
    %v502 = vmax.f32 %v500, %v501
    %v503 = vrot.slane %v502, 2
    %v504 = vmax.f32 %v502, %v503
    %v505 = vrot.slane %v504, 1
    %v506 = vmax.f32 %v504, %v505
    %v507 = vmax.f32 %v394, %v397
    %v508 = vrot.slane %v507, 4
    %v509 = vmax.f32 %v507, %v508
    %v510 = vrot.slane %v509, 2
    %v511 = vmax.f32 %v509, %v510
    %v512 = vrot.slane %v511, 1
    %v513 = vmax.f32 %v511, %v512
    %v514 = vmax.f32 %v402, %v405
    %v515 = vrot.slane %v514, 4
    %v516 = vmax.f32 %v514, %v515
    %v517 = vrot.slane %v516, 2
    %v518 = vmax.f32 %v516, %v517
    %v519 = vrot.slane %v518, 1
    %v520 = vmax.f32 %v518, %v519
    %v521 = vmax.f32 %v410, %v413
    %v522 = vrot.slane %v521, 4
    %v523 = vmax.f32 %v521, %v522
    %v524 = vrot.slane %v523, 2
    %v525 = vmax.f32 %v523, %v524
    %v526 = vrot.slane %v525, 1
    %v527 = vmax.f32 %v525, %v526
    %v528 = vld [vmem:[%s2] sm:$0x1]
    %v530 = vlaneseq
    %v531 = vshrl.u32 %v530, 7
    %v532 = vsub.s32 0, %v531
    %v533 = vrot.slane %v528, %v532
    %v535 = vadd.f32 %v422, %v533
    %v536 = vadd.f32 %v429, %v533
    %v537 = vadd.f32 %v436, %v533
    %v538 = vadd.f32 %v443, %v533
    %v539 = vadd.f32 %v450, %v533
    %v540 = vadd.f32 %v457, %v533
    %v541 = vadd.f32 %v464, %v533
    %v542 = vadd.f32 %v471, %v533
    %v543 = vadd.f32 %v478, %v533
    %v544 = vadd.f32 %v485, %v533
    %v545 = vadd.f32 %v492, %v533
    %v546 = vadd.f32 %v499, %v533
    %v547 = vadd.f32 %v506, %v533
    %v548 = vadd.f32 %v513, %v533
    %v549 = vadd.f32 %v520, %v533
    %v550 = vadd.f32 %v527, %v533
    %v551 = vmax.f32 %v535, 0.0
    %v552 = vmax.f32 %v536, 0.0
    %v553 = vmax.f32 %v537, 0.0
    %v554 = vmax.f32 %v538, 0.0
    %v555 = vmax.f32 %v539, 0.0
    %v556 = vmax.f32 %v540, 0.0
    %v557 = vmax.f32 %v541, 0.0
    %v558 = vmax.f32 %v542, 0.0
    %v559 = vmax.f32 %v543, 0.0
    %v560 = vmax.f32 %v544, 0.0
    %v561 = vmax.f32 %v545, 0.0
    %v562 = vmax.f32 %v546, 0.0
    %v563 = vmax.f32 %v547, 0.0
    %v564 = vmax.f32 %v548, 0.0
    %v565 = vmax.f32 %v549, 0.0
    %v566 = vmax.f32 %v550, 0.0
    %v567 = vpack.c.bf16 %v551, %v551
    %v568 = vpack.c.bf16 %v552, %v552
    %v569 = vpack.c.bf16 %v553, %v553
    %v570 = vpack.c.bf16 %v554, %v554
    %v571 = vpack.c.bf16 %v555, %v555
    %v572 = vpack.c.bf16 %v556, %v556
    %v573 = vpack.c.bf16 %v557, %v557
    %v574 = vpack.c.bf16 %v558, %v558
    %v575 = vpack.c.bf16 %v559, %v559
    %v576 = vpack.c.bf16 %v560, %v560
    %v577 = vpack.c.bf16 %v561, %v561
    %v578 = vpack.c.bf16 %v562, %v562
    %v579 = vpack.c.bf16 %v563, %v563
    %v580 = vpack.c.bf16 %v564, %v564
    %v581 = vpack.c.bf16 %v565, %v565
    %v582 = vpack.c.bf16 %v566, %v566
    %v583 = vld [vmem:[#allocation7] sm:$0xf]
    %v584 = vld [vmem:[#allocation7 + $0x4] sm:$0xf]
    %v585 = vld [vmem:[#allocation7 + $0x8] sm:$0xf]
    %v586 = vld [vmem:[#allocation7 + $0xc] sm:$0xf]
    %v587 = vld [vmem:[#allocation7 + $0x10] sm:$0xf]
    %v588 = vld [vmem:[#allocation7 + $0x14] sm:$0xf]
    %v589 = vld [vmem:[#allocation7 + $0x18] sm:$0xf]
    %v590 = vld [vmem:[#allocation7 + $0x1c] sm:$0xf]
    %v591 = vld [vmem:[#allocation7 + $0x20] sm:$0xf]
    %v592 = vld [vmem:[#allocation7 + $0x24] sm:$0xf]
    %v593 = vld [vmem:[#allocation7 + $0x28] sm:$0xf]
    %v594 = vld [vmem:[#allocation7 + $0x2c] sm:$0xf]
    %v595 = vld [vmem:[#allocation7 + $0x30] sm:$0xf]
    %v596 = vld [vmem:[#allocation7 + $0x34] sm:$0xf]
    %v597 = vld [vmem:[#allocation7 + $0x38] sm:$0xf]
    %v598 = vld [vmem:[#allocation7 + $0x3c] sm:$0xf]
    %v599 = vld [vmem:[%s4] sm:$0x1]
    %v601 = vlaneseq
    %v602 = vshrl.u32 %v601, 7
    %v603 = vsub.s32 0, %v602
    %v604 = vrot.slane %v599, %v603
    %v622 = vunpack.c.l.b16 %v567
    %v623 = vunpack.c.l.b16 %v568
    %v624 = vunpack.c.l.b16 %v569
    %v625 = vunpack.c.l.b16 %v570
    %v626 = vunpack.c.l.b16 %v571
    %v627 = vunpack.c.l.b16 %v572
    %v628 = vunpack.c.l.b16 %v573
    %v629 = vunpack.c.l.b16 %v574
    %v630 = vunpack.c.l.b16 %v575
    %v631 = vunpack.c.l.b16 %v576
    %v632 = vunpack.c.l.b16 %v577
    %v633 = vunpack.c.l.b16 %v578
    %v634 = vunpack.c.l.b16 %v579
    %v635 = vunpack.c.l.b16 %v580
    %v636 = vunpack.c.l.b16 %v581
    %v637 = vunpack.c.l.b16 %v582
    %v638 = vrot.slane %v623, 7
    %vm639 = vcmask 1041409
    %v640 = vsel %vm639, %v638, %v622
    %v641 = vrot.slane %v624, 6
    %vm642 = vcmask 1042434
    %v643 = vsel %vm642, %v641, %v640
    %v644 = vrot.slane %v625, 5
    %vm645 = vcmask 1043459
    %v646 = vsel %vm645, %v644, %v643
    %v647 = vrot.slane %v626, 4
    %vm648 = vcmask 1044484
    %v649 = vsel %vm648, %v647, %v646
    %v650 = vrot.slane %v627, 3
    %vm651 = vcmask 1045509
    %v652 = vsel %vm651, %v650, %v649
    %v653 = vrot.slane %v628, 2
    %vm654 = vcmask 1046534
    %v655 = vsel %vm654, %v653, %v652
    %v656 = vrot.slane %v629, 1
    %vm657 = vcmask 1047559
    %v658 = vsel %vm657, %v656, %v655
    %v659 = vrot.slane %v631, 7
    %v660 = vsel %vm639, %v659, %v630
    %v661 = vrot.slane %v632, 6
    %v662 = vsel %vm642, %v661, %v660
    %v663 = vrot.slane %v633, 5
    %v664 = vsel %vm645, %v663, %v662
    %v665 = vrot.slane %v634, 4
    %v666 = vsel %vm648, %v665, %v664
    %v667 = vrot.slane %v635, 3
    %v668 = vsel %vm651, %v667, %v666
    %v669 = vrot.slane %v636, 2
    %v670 = vsel %vm654, %v669, %v668
    %v671 = vrot.slane %v637, 1
    %v672 = vsel %vm657, %v671, %v670
    %v673 = vpack.c.b16 %v672, %v658
    %v691 = vunpack.c.l.b16 %v583
    %v692 = vunpack.c.l.b16 %v584
    %v693 = vunpack.c.l.b16 %v585
    %v694 = vunpack.c.l.b16 %v586
    %v695 = vunpack.c.l.b16 %v587
    %v696 = vunpack.c.l.b16 %v588
    %v697 = vunpack.c.l.b16 %v589
    %v698 = vunpack.c.l.b16 %v590
    %v699 = vunpack.c.l.b16 %v591
    %v700 = vunpack.c.l.b16 %v592
    %v701 = vunpack.c.l.b16 %v593
    %v702 = vunpack.c.l.b16 %v594
    %v703 = vunpack.c.l.b16 %v595
    %v704 = vunpack.c.l.b16 %v596
    %v705 = vunpack.c.l.b16 %v597
    %v706 = vunpack.c.l.b16 %v598
    %v707 = vpack.c.b16 %v692, %v691
    %v708 = vpack.c.b16 %v694, %v693
    %v709 = vpack.c.b16 %v696, %v695
    %v710 = vpack.c.b16 %v698, %v697
    %v711 = vpack.c.b16 %v700, %v699
    %v712 = vpack.c.b16 %v702, %v701
    %v713 = vpack.c.b16 %v704, %v703
    %v714 = vpack.c.b16 %v706, %v705
    %723 = vmatprep.subr.bf16.mxu0 0
    %724 = vmatpush1.bf16.msra.mxu0 %v714
    %725 = vmatprep.subr.bf16.mxu0 0
    %726 = vmatpush1.bf16.msra.mxu0 %v713
    %727 = vmatprep.subr.bf16.mxu0 0
    %728 = vmatpush1.bf16.msra.mxu0 %v712
    %729 = vmatprep.subr.bf16.mxu0 0
    %730 = vmatpush1.bf16.msra.mxu0 %v711
    %731 = vmatprep.subr.bf16.mxu0 0
    %732 = vmatpush1.bf16.msra.mxu0 %v710
    %733 = vmatprep.subr.bf16.mxu0 0
    %734 = vmatpush1.bf16.msra.mxu0 %v709
    %735 = vmatprep.subr.bf16.mxu0 0
    %736 = vmatpush1.bf16.msra.mxu0 %v708
    %737 = vmatprep.subr.bf16.mxu0 0
    %738 = vmatpush1.bf16.msra.mxu0 %v707
    %739 = vmatprep.subr.bf16.mxu0 0
    %740 = vmatpush2.bf16.msra.mxu0 0
    %741 = vmatprep.subr.bf16.mxu0 0
    %742 = vmatpush2.bf16.msra.mxu0 0
    %743 = vmatprep.subr.bf16.mxu0 0
    %744 = vmatpush2.bf16.msra.mxu0 0
    %745 = vmatprep.subr.bf16.mxu0 0
    %746 = vmatpush2.bf16.msra.mxu0 0
    %747 = vmatprep.subr.bf16.mxu0 0
    %748 = vmatpush2.bf16.msra.mxu0 0
    %749 = vmatprep.subr.bf16.mxu0 0
    %750 = vmatpush2.bf16.msra.mxu0 0
    %751 = vmatprep.subr.bf16.mxu0 0
    %752 = vmatpush2.bf16.msra.mxu0 0
    %753 = vmatprep.subr.bf16.mxu0 0
    %754 = vmatpush2.bf16.msra.mxu0 0
    %755 = vmatprep.mubr.bf16.mxu0 0
    %756 = vmatmul.mubr.bf16.gmra.mxu0 %v673
    %v757 = vpop.f32.mrf.mxu0
    %v758 = vadd.f32 %v604, %v757
    %v759 = vpop.f32.mrf.mxu0
    %v760 = vpop.f32.mrf.mxu0
    %v761 = vadd.f32 %v604, %v760
    %v762 = vpop.f32.mrf.mxu0
    %763 = vdwg.mxu0
    %764 = vst [vmem:[#allocation8] sm:$0xff] %v758
    %765 = vst [vmem:[#allocation8 + $0x8] sm:$0xff] %v761
    // Predicated region
    $region34: #{tpu_custom_call.1} parent=1 // pred_check
      _
    $region35: #{tpu_custom_call.1} parent=1 // pred_check_branch
      %767 = sbr.rel (0) target = $region37
    $region36: #{tpu_custom_call.1} parent=1 // pred_region
      %s769 = ssub.s32 256, 256
      %770 = vsyncadd [#allocation4], %s769
      %s771 = sshll.u32 [#allocation8], 4
      %s772 = int_to_ptr.vmem [resolvable:$true] %s771
      %777 = dma.vmem_to_hbm [thread:$0]  %s772, 256, %s5, [#allocation4], 128, 128, 8
    $region37: #{tpu_custom_call.1} parent=1 // pred_fallthru
      _
    // Predicated region
    $region38: #{tpu_custom_call.1} parent=1 // pred_check
      _
    $region39: #{tpu_custom_call.1} parent=1 // pred_check_branch
      %779 = sbr.rel (0) target = $region41
    $region40: #{tpu_custom_call.1} parent=1 // pred_region
      %780 = dma.done [#allocation4], 256
    $region41: #{tpu_custom_call.1} parent=1 // pred_fallthru
      _
    %781 = vsyncpa [#allocation3], 1
    %782 = vsyncpa [#allocation6], 1
    %783 = vsyncpa [#allocation4], 1

</llo_original>
